<compile_context>
chip_gen: v7x
topology: tpu7x:2x2x1
jax: 0.10.0
libtpu: 0.0.40
codegen_flags: <defaults>
</compile_context>

<pallas_src>
import jax
import jax.numpy as jnp
from jax import lax
from jax.experimental import pallas as pl
from jax.experimental.pallas import tpu as pltpu


def _layernorm(x, gamma, beta, eps=1e-5):
    # PyTorch nn.LayerNorm: biased variance over the last dim, eps=1e-5.
    mean = jnp.mean(x, axis=-1, keepdims=True)
    var = jnp.mean((x - mean) ** 2, axis=-1, keepdims=True)
    return (x - mean) * jax.lax.rsqrt(var + eps) * gamma + beta


# Slab row layout (built in the wrapper):
#   [0,   H)   : [W2 | W3] lane-padded            (fused q|v projection)
#   [H,  3H)   : [[W1], [0]] lane-padded          (k from the residual rows)
#   [3H, 4H)   : Wc
#   [4H, 6H)   : Wf1
#   [6H, 7H)   : Wf2
#   7H         : [b2 | b3] fused bias row
#   7H+1..7H+10: b1, bc, gc, bec, bf1, g1, be1, bf2, g2, be2
#   7H+11      : query_embed flattened to (1, 2*n_q*H)
def _query_encoder_kernel(ctx_ref, resqf_ref, maskadd_ref, slab_ref, out_ref):
    H = ctx_ref.shape[1]
    out_dim = out_ref.shape[1]
    n_rep = out_dim // H                                   # = 2 * n_q

    # ---- static views into the packed parameter slab (free) ----
    w_qv = slab_ref[0:H, :]                                # lanes [0:H]=W2, [H:2H]=W3, rest 0
    w_k = slab_ref[H:3 * H, 0:H]
    w_c = slab_ref[3 * H:4 * H, 0:H]
    w_f1 = slab_ref[4 * H:6 * H, 0:H]
    w_f2 = slab_ref[6 * H:7 * H, 0:H]
    b_qv = slab_ref[7 * H:7 * H + 1, :]
    r0 = 7 * H + 1

    def vec(i):                                            # (1, H) parameter row
        return slab_ref[r0 + i:r0 + i + 1, 0:H]

    lq_row = slab_ref[r0 + 10:r0 + 11, 0:out_dim]

    ctx = ctx_ref[...]                                     # (bs*L, H)
    resqf = resqf_ref[...]                                 # (bs*n_ph, 2H) = [ctx[:,0,:] rep | qf]

    # ---- fused q|v projection: one MXU push + one full-width bias add ----
    qv = jnp.dot(ctx, w_qv, preferred_element_type=jnp.float32) + b_qv     # (bs*L, SW)
    q = qv[:, 0:H]
    v = qv[:, H:2 * H]

    # ---- k directly in query-row layout (residual repeated per phrase) ----
    k = jnp.dot(resqf, w_k, preferred_element_type=jnp.float32) + vec(0)   # (bs*n_ph, H)

    # ---- attention over the flattened batch: additive -inf mask removes both
    #      padded positions and cross-batch columns, so two plain 2-D matmuls
    #      replace the per-batch einsum loop ----
    scores = lax.dot_general(k, q, (((1,), (1,)), ((), ())),
                             preferred_element_type=jnp.float32)           # (bs*n_ph, bs*L)
    scores = scores + maskadd_ref[...]
    m = jnp.max(scores, axis=-1, keepdims=True)
    p = jnp.exp(scores - m)                                # masked cols -> exactly 0
    attn = p / jnp.sum(p, axis=-1, keepdims=True)
    context = jnp.dot(attn, v, preferred_element_type=jnp.float32)         # (bs*n_ph, H)

    # ---- context_out: Linear + LayerNorm; residual add fused with the concat ----
    c = _layernorm(jnp.dot(context, w_c, preferred_element_type=jnp.float32) + vec(1),
                   vec(2), vec(3))
    cat = jnp.concatenate([c, jnp.zeros_like(c)], axis=-1) + resqf         # [c+res | qf]

    # ---- fuse_encoder_query MLP ----
    h = jnp.dot(cat, w_f1, preferred_element_type=jnp.float32) + vec(4)
    h = jnp.maximum(_layernorm(h, vec(5), vec(6)), 0.0)
    # TODO(synk): nn.Dropout(0.1) is identity in eval mode; training-mode dropout not implemented.
    h = jnp.dot(h, w_f2, preferred_element_type=jnp.float32) + vec(7)
    h = jnp.maximum(_layernorm(h, vec(8), vec(9)), 0.0)                    # (bs*n_ph, H)

    # ---- lane-dense store: phrase feature repeated 2*n_q times + query embeds ----
    out_ref[...] = jnp.concatenate([h] * n_rep, axis=-1) + lq_row


def query_encoder_forward(params, lang_context_feat, lang_query_feat,
                          mask_query_context, *, batch_blocks=1):
    f32 = jnp.float32
    bs, L, H = lang_context_feat.shape
    n_ph = lang_query_feat.shape[1]
    lq = params["query_embed"]                              # (n_q, 2H)
    n_q = lq.shape[0]
    out_dim = 2 * n_q * H

    assert bs % batch_blocks == 0
    bsb = bs // batch_blocks
    Rr = bsb * n_ph                                         # query rows per grid block
    Rc = bsb * L                                            # context rows per grid block

    # slab lane width: cover the widest packed row, rounded up to 128 lanes
    SW = ((max(2 * H, out_dim, 128) + 127) // 128) * 128

    def pad_lanes(a):
        a = jnp.asarray(a, f32)
        if a.ndim == 1:
            a = a[None, :]
        return jnp.pad(a, ((0, 0), (0, SW - a.shape[1])))

    # --- pack every parameter into a single (7H+12, SW) slab ---
    w_qv = jnp.concatenate([params["W2"], params["W3"]], axis=1)           # (H, 2H)
    w_k = jnp.concatenate([params["W1"], jnp.zeros((H, H), f32)], axis=0)  # (2H, H)
    slab = jnp.concatenate([
        pad_lanes(w_qv),
        pad_lanes(w_k),
        pad_lanes(params["Wc"]),
        pad_lanes(params["Wf1"]),
        pad_lanes(params["Wf2"]),
        pad_lanes(jnp.concatenate([params["b2"], params["b3"]])),
        pad_lanes(params["b1"]),
        pad_lanes(params["bc"]), pad_lanes(params["gc"]), pad_lanes(params["bec"]),
        pad_lanes(params["bf1"]), pad_lanes(params["g1"]), pad_lanes(params["be1"]),
        pad_lanes(params["bf2"]), pad_lanes(params["g2"]), pad_lanes(params["be2"]),
        pad_lanes(lq.reshape(-1)),
    ], axis=0)                                              # (7H+12, SW)
    slab_rows = 7 * H + 12

    # --- flat 2-D activations in their kernel-consumption layout ---
    ctx2d = lang_context_feat.reshape(bs * L, H).astype(f32)
    residual = jnp.repeat(lang_context_feat[:, 0, :], n_ph, axis=0)        # (bs*n_ph, H)
    resqf = jnp.concatenate(
        [residual, lang_query_feat.reshape(bs * n_ph, H)], axis=-1).astype(f32)

    # additive -inf attention mask, already shaped (bs*n_ph, bsb*L):
    #   0 where column belongs to this row's batch AND position is not masked,
    #   -inf otherwise (covers both the padding mask and cross-batch columns).
    local = jnp.arange(bs) % bsb
    same_batch = jnp.arange(bsb)[None, :] == local[:, None]                # (bs, bsb)
    allow = same_batch[:, None, :, None] & jnp.logical_not(mask_query_context)[:, :, None, :]
    maskadd = jnp.where(allow, f32(0), f32(-jnp.inf)).astype(f32)
    maskadd = maskadd.reshape(bs * n_ph, bsb * L)

    in_specs = [
        pl.BlockSpec((Rc, H), lambda i: (i, 0)),
        pl.BlockSpec((Rr, 2 * H), lambda i: (i, 0)),
        pl.BlockSpec((Rr, Rc), lambda i: (i, 0)),
        pl.BlockSpec((slab_rows, SW), lambda i: (0, 0)),
    ]
    out_specs = pl.BlockSpec((Rr, out_dim), lambda i: (i, 0))
    out_shape = jax.ShapeDtypeStruct((bs * n_ph, out_dim), f32)

    flops = 2 * (bs * L * H * (2 * H)          # q|v projection
                 + bs * n_ph * (2 * H) * H     # k projection
                 + bs * n_ph * H * Rc          # scores
                 + bs * n_ph * Rc * H          # attn @ v
                 + bs * n_ph * H * H           # Wc
                 + bs * n_ph * (2 * H) * H     # Wf1
                 + bs * n_ph * H * H)          # Wf2
    bytes_accessed = 4 * (ctx2d.size + resqf.size + maskadd.size + slab.size
                          + bs * n_ph * out_dim)
    cost = pl.CostEstimate(flops=flops,
                           transcendentals=bs * n_ph * Rc,
                           bytes_accessed=bytes_accessed)

    out2d = pl.pallas_call(
        _query_encoder_kernel,
        grid=(batch_blocks,),
        in_specs=in_specs,
        out_specs=out_specs,
        out_shape=out_shape,
        cost_estimate=cost,
        compiler_params=pltpu.CompilerParams(dimension_semantics=("parallel",)),
    )(ctx2d, resqf, maskadd, slab)

    # (bs*n_ph, 2*n_q*H) -> (n_ph*n_q, bs, 2H) -> split into the two H halves,
    # matching phrase_queries.view(bs, n_ph*n_q, -1).transpose(0, 1) + torch.split(..., H).
    pq = out2d.reshape(bs, n_ph * n_q, 2 * H).transpose(1, 0, 2)
    return pq[..., :H], pq[..., H:]


def reference_forward(p, ctx, qf, mask):
    """Pure-JAX mirror of the PyTorch forward (for verification)."""
    bs, L, H = ctx.shape
    n_ph = qf.shape[1]
    lq = p["query_embed"]
    n_q = lq.shape[0]
    k = ctx[:, 0:1, :] @ p["W1"] + p["b1"]
    q = ctx @ p["W2"] + p["b2"]
    v = ctx @ p["W3"] + p["b3"]
    att = jnp.einsum("bih,blh->bil", k, q)
    att = jnp.broadcast_to(att, (bs, n_ph, L))
    att = jnp.where(mask, -jnp.inf, att)
    attn = jax.nn.softmax(att, axis=-1)
    context = jnp.einsum("bpl,blh->bph", attn, v)
    context = _layernorm(context @ p["Wc"] + p["bc"], p["gc"], p["bec"])
    context = ctx[:, None, 0, :] + context
    cat = jnp.concatenate([context, qf], axis=-1)
    h = jax.nn.relu(_layernorm(cat @ p["Wf1"] + p["bf1"], p["g1"], p["be1"]))
    h = jax.nn.relu(_layernorm(h @ p["Wf2"] + p["bf2"], p["g2"], p["be2"]))
    pq = jnp.concatenate([h, h], axis=-1)[:, :, None, :] + lq[None, None]
    pq = pq.reshape(bs, n_ph * n_q, 2 * H).transpose(1, 0, 2)
    return pq[..., :H], pq[..., H:]


def init_params(key, hidden_dim, num_queries_per_phrase):
    H = hidden_dim
    keys = jax.random.split(key, 16)

    def lin(k, din, dout):
        kw, kb = jax.random.split(k)
        return (jax.random.normal(kw, (din, dout), jnp.float32) * 0.1,
                jax.random.normal(kb, (dout,), jnp.float32) * 0.1)

    W1, b1 = lin(keys[0], H, H)
    W2, b2 = lin(keys[1], H, H)
    W3, b3 = lin(keys[2], H, H)
    Wc, bc = lin(keys[3], H, H)
    Wf1, bf1 = lin(keys[4], 2 * H, H)
    Wf2, bf2 = lin(keys[5], H, H)
    query_embed = jax.random.normal(keys[6], (num_queries_per_phrase, 2 * H), jnp.float32)
    gc = 1.0 + 0.1 * jax.random.normal(keys[7], (H,), jnp.float32)
    bec = 0.1 * jax.random.normal(keys[8], (H,), jnp.float32)
    g1 = 1.0 + 0.1 * jax.random.normal(keys[9], (H,), jnp.float32)
    be1 = 0.1 * jax.random.normal(keys[10], (H,), jnp.float32)
    g2 = 1.0 + 0.1 * jax.random.normal(keys[11], (H,), jnp.float32)
    be2 = 0.1 * jax.random.normal(keys[12], (H,), jnp.float32)
    return dict(W1=W1, b1=b1, W2=W2, b2=b2, W3=W3, b3=b3,
                Wc=Wc, bc=bc, gc=gc, bec=bec,
                Wf1=Wf1, bf1=bf1, g1=g1, be1=be1,
                Wf2=Wf2, bf2=bf2, g2=g2, be2=be2,
                query_embed=query_embed)


if __name__ == "__main__":
    key = jax.random.PRNGKey(0)
    bs, L, n_ph, H, n_q = 2, 8, 4, 32, 2    # batch, context seq, phrases, hidden, queries/phrase

    kp, kc, kq, km = jax.random.split(key, 4)
    params = init_params(kp, H, n_q)
    lang_context_feat = jax.random.normal(kc, (bs, L, H), jnp.float32)
    lang_query_feat = jax.random.normal(kq, (bs, n_ph, H), jnp.float32)
    mask_query_context = jax.random.bernoulli(km, 0.3, (bs, n_ph, L))
    # keep at least one unmasked context position per (batch, phrase) row
    mask_query_context = mask_query_context.at[:, :, 0].set(False)

    fwd = jax.jit(query_encoder_forward, static_argnames=("batch_blocks",))
    out_a, out_b = fwd(params, lang_context_feat, lang_query_feat, mask_query_context)
    jax.block_until_ready((out_a, out_b))

    ref_a, ref_b = reference_forward(params, lang_context_feat,
                                     lang_query_feat, mask_query_context)
    assert out_a.shape == (n_ph * n_q, bs, H)
    assert out_b.shape == (n_ph * n_q, bs, H)
    assert jnp.allclose(out_a, ref_a, atol=1e-4, rtol=1e-4)
    assert jnp.allclose(out_b, ref_b, atol=1e-4, rtol=1e-4)
    print("KERNEL_OK")
</pallas_src>

<mosaic_0001>
module attributes {stable_mosaic.version = 11 : i64} {
  func.func @_query_encoder_kernel(%arg0: i32, %arg1: memref<16x32xf32, #tpu.memory_space<vmem>>, %arg2: memref<8x64xf32, #tpu.memory_space<vmem>>, %arg3: memref<8x16xf32, #tpu.memory_space<vmem>>, %arg4: memref<236x128xf32, #tpu.memory_space<vmem>>, %arg5: memref<8x128xf32, #tpu.memory_space<vmem>>) attributes {dimension_semantics = [#tpu.dimension_semantics<parallel>], iteration_bounds = array<i64: 1>, scalar_prefetch = 0 : i64, scratch_operands = 0 : i64, tpu.core_type = #tpu.core_type<tc>, window_params = [{transform_indices = @transform_0, window_bounds = array<i64: 16, 32>}, {transform_indices = @transform_1, window_bounds = array<i64: 8, 64>}, {transform_indices = @transform_2, window_bounds = array<i64: 8, 16>}, {pipeline_mode = #tpu.pipeline_mode<synchronous>, transform_indices = @transform_3, window_bounds = array<i64: 236, 128>}, {transform_indices = @transform_4, window_bounds = array<i64: 8, 128>}]} {
    %c0 = arith.constant 0 : index
    %c0_0 = arith.constant 0 : index
    %0 = vector.load %arg4[%c0, %c0_0] : memref<236x128xf32, #tpu.memory_space<vmem>>, vector<32x128xf32>
    %c32 = arith.constant 32 : index
    %c0_1 = arith.constant 0 : index
    %1 = vector.load %arg4[%c32, %c0_1] : memref<236x128xf32, #tpu.memory_space<vmem>>, vector<64x32xf32>
    %c96 = arith.constant 96 : index
    %c0_2 = arith.constant 0 : index
    %2 = vector.load %arg4[%c96, %c0_2] : memref<236x128xf32, #tpu.memory_space<vmem>>, vector<32x32xf32>
    %c128 = arith.constant 128 : index
    %c0_3 = arith.constant 0 : index
    %3 = vector.load %arg4[%c128, %c0_3] : memref<236x128xf32, #tpu.memory_space<vmem>>, vector<64x32xf32>
    %c192 = arith.constant 192 : index
    %c0_4 = arith.constant 0 : index
    %4 = vector.load %arg4[%c192, %c0_4] : memref<236x128xf32, #tpu.memory_space<vmem>>, vector<32x32xf32>
    %c224 = arith.constant 224 : index
    %c0_5 = arith.constant 0 : index
    %5 = vector.load %arg4[%c224, %c0_5] : memref<236x128xf32, #tpu.memory_space<vmem>>, vector<1x128xf32>
    %c235 = arith.constant 235 : index
    %c0_6 = arith.constant 0 : index
    %6 = vector.load %arg4[%c235, %c0_6] : memref<236x128xf32, #tpu.memory_space<vmem>>, vector<1x128xf32>
    %c0_7 = arith.constant 0 : index
    %c0_8 = arith.constant 0 : index
    %7 = vector.load %arg1[%c0_7, %c0_8] : memref<16x32xf32, #tpu.memory_space<vmem>>, vector<16x32xf32>
    %c0_9 = arith.constant 0 : index
    %c0_10 = arith.constant 0 : index
    %8 = vector.load %arg2[%c0_9, %c0_10] : memref<8x64xf32, #tpu.memory_space<vmem>>, vector<8x64xf32>
    %cst = arith.constant dense<0.000000e+00> : vector<16x128xf32>
    %9 = tpu.matmul %7, %0, %cst {dimension_numbers = #tpu.dot_dimension_numbers<[1], [0], [0], [1], [0, 0, 1, 1], [], []>} : vector<16x32xf32>, vector<32x128xf32>, vector<16x128xf32> -> vector<16x128xf32>
    %10 = vector.broadcast %5 : vector<1x128xf32> to vector<16x128xf32>
    %11 = arith.addf %9, %10 : vector<16x128xf32>
    %12 = vector.extract_strided_slice %11 {offsets = [0, 0], sizes = [16, 32], strides = [1, 1]} : vector<16x128xf32> to vector<16x32xf32>
    %13 = vector.extract_strided_slice %11 {offsets = [0, 32], sizes = [16, 32], strides = [1, 1]} : vector<16x128xf32> to vector<16x32xf32>
    %cst_11 = arith.constant dense<0.000000e+00> : vector<8x32xf32>
    %14 = tpu.matmul %8, %1, %cst_11 {dimension_numbers = #tpu.dot_dimension_numbers<[1], [0], [0], [1], [0, 0, 1, 1], [], []>} : vector<8x64xf32>, vector<64x32xf32>, vector<8x32xf32> -> vector<8x32xf32>
    %c225 = arith.constant 225 : index
    %c0_12 = arith.constant 0 : index
    %15 = vector.load %arg4[%c225, %c0_12] : memref<236x128xf32, #tpu.memory_space<vmem>>, vector<1x32xf32>
    %16 = vector.broadcast %15 : vector<1x32xf32> to vector<8x32xf32>
    %17 = arith.addf %14, %16 : vector<8x32xf32>
    %cst_13 = arith.constant dense<0.000000e+00> : vector<8x16xf32>
    %18 = tpu.matmul %17, %12, %cst_13 {dimension_numbers = #tpu.dot_dimension_numbers<[1], [1], [0], [0], [0, 0, 1, 0], [], []>} : vector<8x32xf32>, vector<16x32xf32>, vector<8x16xf32> -> vector<8x16xf32>
    %c0_14 = arith.constant 0 : index
    %c0_15 = arith.constant 0 : index
    %19 = vector.load %arg3[%c0_14, %c0_15] : memref<8x16xf32, #tpu.memory_space<vmem>>, vector<8x16xf32>
    %20 = arith.addf %18, %19 : vector<8x16xf32>
    %cst_16 = arith.constant dense<0xFF800000> : vector<8xf32>
    %21 = vector.multi_reduction <maximumf>, %20, %cst_16 [1] : vector<8x16xf32> to vector<8xf32>
    %22 = vector.shape_cast %21 : vector<8xf32> to vector<8x1xf32>
    %23 = vector.broadcast %22 : vector<8x1xf32> to vector<8x16xf32>
    %24 = arith.subf %20, %23 : vector<8x16xf32>
    %25 = math.exp %24 : vector<8x16xf32>
    %cst_17 = arith.constant dense<0.000000e+00> : vector<8xf32>
    %26 = vector.multi_reduction <add>, %25, %cst_17 [1] : vector<8x16xf32> to vector<8xf32>
    %27 = vector.shape_cast %26 : vector<8xf32> to vector<8x1xf32>
    %28 = vector.broadcast %27 : vector<8x1xf32> to vector<8x16xf32>
    %29 = arith.divf %25, %28 : vector<8x16xf32>
    %cst_18 = arith.constant dense<0.000000e+00> : vector<8x32xf32>
    %30 = tpu.matmul %29, %13, %cst_18 {dimension_numbers = #tpu.dot_dimension_numbers<[1], [0], [0], [1], [0, 0, 1, 1], [], []>} : vector<8x16xf32>, vector<16x32xf32>, vector<8x32xf32> -> vector<8x32xf32>
    %cst_19 = arith.constant dense<0.000000e+00> : vector<8x32xf32>
    %31 = tpu.matmul %30, %2, %cst_19 {dimension_numbers = #tpu.dot_dimension_numbers<[1], [0], [0], [1], [0, 0, 1, 1], [], []>} : vector<8x32xf32>, vector<32x32xf32>, vector<8x32xf32> -> vector<8x32xf32>
    %c226 = arith.constant 226 : index
    %c0_20 = arith.constant 0 : index
    %32 = vector.load %arg4[%c226, %c0_20] : memref<236x128xf32, #tpu.memory_space<vmem>>, vector<1x32xf32>
    %33 = vector.broadcast %32 : vector<1x32xf32> to vector<8x32xf32>
    %34 = arith.addf %31, %33 : vector<8x32xf32>
    %c227 = arith.constant 227 : index
    %c0_21 = arith.constant 0 : index
    %35 = vector.load %arg4[%c227, %c0_21] : memref<236x128xf32, #tpu.memory_space<vmem>>, vector<1x32xf32>
    %c228 = arith.constant 228 : index
    %c0_22 = arith.constant 0 : index
    %36 = vector.load %arg4[%c228, %c0_22] : memref<236x128xf32, #tpu.memory_space<vmem>>, vector<1x32xf32>
    %cst_23 = arith.constant dense<0.000000e+00> : vector<8xf32>
    %37 = vector.multi_reduction <add>, %34, %cst_23 [1] : vector<8x32xf32> to vector<8xf32>
    %38 = vector.shape_cast %37 : vector<8xf32> to vector<8x1xf32>
    %cst_24 = arith.constant 3.200000e+01 : f32
    %39 = vector.broadcast %cst_24 : f32 to vector<8x1xf32>
    %40 = arith.divf %38, %39 : vector<8x1xf32>
    %41 = vector.broadcast %40 : vector<8x1xf32> to vector<8x32xf32>
    %42 = arith.subf %34, %41 : vector<8x32xf32>
    %43 = arith.mulf %42, %42 : vector<8x32xf32>
    %cst_25 = arith.constant dense<0.000000e+00> : vector<8xf32>
    %44 = vector.multi_reduction <add>, %43, %cst_25 [1] : vector<8x32xf32> to vector<8xf32>
    %45 = vector.shape_cast %44 : vector<8xf32> to vector<8x1xf32>
    %cst_26 = arith.constant 3.200000e+01 : f32
    %46 = vector.broadcast %cst_26 : f32 to vector<8x1xf32>
    %47 = arith.divf %45, %46 : vector<8x1xf32>
    %48 = vector.broadcast %40 : vector<8x1xf32> to vector<8x32xf32>
    %49 = arith.subf %34, %48 : vector<8x32xf32>
    %cst_27 = arith.constant 9.99999974E-6 : f32
    %50 = vector.broadcast %cst_27 : f32 to vector<8x1xf32>
    %51 = arith.addf %47, %50 : vector<8x1xf32>
    %52 = math.rsqrt %51 : vector<8x1xf32>
    %53 = vector.broadcast %52 : vector<8x1xf32> to vector<8x32xf32>
    %54 = arith.mulf %49, %53 : vector<8x32xf32>
    %55 = vector.broadcast %35 : vector<1x32xf32> to vector<8x32xf32>
    %56 = arith.mulf %54, %55 : vector<8x32xf32>
    %57 = vector.broadcast %36 : vector<1x32xf32> to vector<8x32xf32>
    %58 = arith.addf %56, %57 : vector<8x32xf32>
    %cst_28 = arith.constant 0.000000e+00 : f32
    %59 = vector.broadcast %cst_28 : f32 to vector<8x32xf32>
    %60 = tpu.concatenate %58, %59 in 1 : vector<8x32xf32>, vector<8x32xf32> -> vector<8x64xf32>
    %61 = arith.addf %60, %8 : vector<8x64xf32>
    %cst_29 = arith.constant dense<0.000000e+00> : vector<8x32xf32>
    %62 = tpu.matmul %61, %3, %cst_29 {dimension_numbers = #tpu.dot_dimension_numbers<[1], [0], [0], [1], [0, 0, 1, 1], [], []>} : vector<8x64xf32>, vector<64x32xf32>, vector<8x32xf32> -> vector<8x32xf32>
    %c229 = arith.constant 229 : index
    %c0_30 = arith.constant 0 : index
    %63 = vector.load %arg4[%c229, %c0_30] : memref<236x128xf32, #tpu.memory_space<vmem>>, vector<1x32xf32>
    %64 = vector.broadcast %63 : vector<1x32xf32> to vector<8x32xf32>
    %65 = arith.addf %62, %64 : vector<8x32xf32>
    %c230 = arith.constant 230 : index
    %c0_31 = arith.constant 0 : index
    %66 = vector.load %arg4[%c230, %c0_31] : memref<236x128xf32, #tpu.memory_space<vmem>>, vector<1x32xf32>
    %c231 = arith.constant 231 : index
    %c0_32 = arith.constant 0 : index
    %67 = vector.load %arg4[%c231, %c0_32] : memref<236x128xf32, #tpu.memory_space<vmem>>, vector<1x32xf32>
    %cst_33 = arith.constant dense<0.000000e+00> : vector<8xf32>
    %68 = vector.multi_reduction <add>, %65, %cst_33 [1] : vector<8x32xf32> to vector<8xf32>
    %69 = vector.shape_cast %68 : vector<8xf32> to vector<8x1xf32>
    %cst_34 = arith.constant 3.200000e+01 : f32
    %70 = vector.broadcast %cst_34 : f32 to vector<8x1xf32>
    %71 = arith.divf %69, %70 : vector<8x1xf32>
    %72 = vector.broadcast %71 : vector<8x1xf32> to vector<8x32xf32>
    %73 = arith.subf %65, %72 : vector<8x32xf32>
    %74 = arith.mulf %73, %73 : vector<8x32xf32>
    %cst_35 = arith.constant dense<0.000000e+00> : vector<8xf32>
    %75 = vector.multi_reduction <add>, %74, %cst_35 [1] : vector<8x32xf32> to vector<8xf32>
    %76 = vector.shape_cast %75 : vector<8xf32> to vector<8x1xf32>
    %cst_36 = arith.constant 3.200000e+01 : f32
    %77 = vector.broadcast %cst_36 : f32 to vector<8x1xf32>
    %78 = arith.divf %76, %77 : vector<8x1xf32>
    %79 = vector.broadcast %71 : vector<8x1xf32> to vector<8x32xf32>
    %80 = arith.subf %65, %79 : vector<8x32xf32>
    %cst_37 = arith.constant 9.99999974E-6 : f32
    %81 = vector.broadcast %cst_37 : f32 to vector<8x1xf32>
    %82 = arith.addf %78, %81 : vector<8x1xf32>
    %83 = math.rsqrt %82 : vector<8x1xf32>
    %84 = vector.broadcast %83 : vector<8x1xf32> to vector<8x32xf32>
    %85 = arith.mulf %80, %84 : vector<8x32xf32>
    %86 = vector.broadcast %66 : vector<1x32xf32> to vector<8x32xf32>
    %87 = arith.mulf %85, %86 : vector<8x32xf32>
    %88 = vector.broadcast %67 : vector<1x32xf32> to vector<8x32xf32>
    %89 = arith.addf %87, %88 : vector<8x32xf32>
    %cst_38 = arith.constant 0.000000e+00 : f32
    %90 = vector.broadcast %cst_38 : f32 to vector<8x32xf32>
    %91 = arith.maximumf %89, %90 : vector<8x32xf32>
    %cst_39 = arith.constant dense<0.000000e+00> : vector<8x32xf32>
    %92 = tpu.matmul %91, %4, %cst_39 {dimension_numbers = #tpu.dot_dimension_numbers<[1], [0], [0], [1], [0, 0, 1, 1], [], []>} : vector<8x32xf32>, vector<32x32xf32>, vector<8x32xf32> -> vector<8x32xf32>
    %c232 = arith.constant 232 : index
    %c0_40 = arith.constant 0 : index
    %93 = vector.load %arg4[%c232, %c0_40] : memref<236x128xf32, #tpu.memory_space<vmem>>, vector<1x32xf32>
    %94 = vector.broadcast %93 : vector<1x32xf32> to vector<8x32xf32>
    %95 = arith.addf %92, %94 : vector<8x32xf32>
    %c233 = arith.constant 233 : index
    %c0_41 = arith.constant 0 : index
    %96 = vector.load %arg4[%c233, %c0_41] : memref<236x128xf32, #tpu.memory_space<vmem>>, vector<1x32xf32>
    %c234 = arith.constant 234 : index
    %c0_42 = arith.constant 0 : index
    %97 = vector.load %arg4[%c234, %c0_42] : memref<236x128xf32, #tpu.memory_space<vmem>>, vector<1x32xf32>
    %cst_43 = arith.constant dense<0.000000e+00> : vector<8xf32>
    %98 = vector.multi_reduction <add>, %95, %cst_43 [1] : vector<8x32xf32> to vector<8xf32>
    %99 = vector.shape_cast %98 : vector<8xf32> to vector<8x1xf32>
    %cst_44 = arith.constant 3.200000e+01 : f32
    %100 = vector.broadcast %cst_44 : f32 to vector<8x1xf32>
    %101 = arith.divf %99, %100 : vector<8x1xf32>
    %102 = vector.broadcast %101 : vector<8x1xf32> to vector<8x32xf32>
    %103 = arith.subf %95, %102 : vector<8x32xf32>
    %104 = arith.mulf %103, %103 : vector<8x32xf32>
    %cst_45 = arith.constant dense<0.000000e+00> : vector<8xf32>
    %105 = vector.multi_reduction <add>, %104, %cst_45 [1] : vector<8x32xf32> to vector<8xf32>
    %106 = vector.shape_cast %105 : vector<8xf32> to vector<8x1xf32>
    %cst_46 = arith.constant 3.200000e+01 : f32
    %107 = vector.broadcast %cst_46 : f32 to vector<8x1xf32>
    %108 = arith.divf %106, %107 : vector<8x1xf32>
    %109 = vector.broadcast %101 : vector<8x1xf32> to vector<8x32xf32>
    %110 = arith.subf %95, %109 : vector<8x32xf32>
    %cst_47 = arith.constant 9.99999974E-6 : f32
    %111 = vector.broadcast %cst_47 : f32 to vector<8x1xf32>
    %112 = arith.addf %108, %111 : vector<8x1xf32>
    %113 = math.rsqrt %112 : vector<8x1xf32>
    %114 = vector.broadcast %113 : vector<8x1xf32> to vector<8x32xf32>
    %115 = arith.mulf %110, %114 : vector<8x32xf32>
    %116 = vector.broadcast %96 : vector<1x32xf32> to vector<8x32xf32>
    %117 = arith.mulf %115, %116 : vector<8x32xf32>
    %118 = vector.broadcast %97 : vector<1x32xf32> to vector<8x32xf32>
    %119 = arith.addf %117, %118 : vector<8x32xf32>
    %cst_48 = arith.constant 0.000000e+00 : f32
    %120 = vector.broadcast %cst_48 : f32 to vector<8x32xf32>
    %121 = arith.maximumf %119, %120 : vector<8x32xf32>
    %122 = tpu.concatenate %121, %121, %121, %121 in 1 : vector<8x32xf32>, vector<8x32xf32>, vector<8x32xf32>, vector<8x32xf32> -> vector<8x128xf32>
    %123 = vector.broadcast %6 : vector<1x128xf32> to vector<8x128xf32>
    %124 = arith.addf %122, %123 : vector<8x128xf32>
    %c0_49 = arith.constant 0 : index
    %c0_50 = arith.constant 0 : index
    %125 = vector.load %arg5[%c0_49, %c0_50] : memref<8x128xf32, #tpu.memory_space<vmem>>, vector<8x128xf32>
    tpu.vector_store %arg5[%c0_49, %c0_50], %124 {strides = array<i32>} : memref<8x128xf32, #tpu.memory_space<vmem>>, vector<8x128xf32>,
    return
  }
  func.func @transform_0(%arg0: i32) -> (i32, i32) {
    %c0_i32 = arith.constant 0 : i32
    %c0_i32_0 = arith.constant 0 : i32
    return %arg0, %c0_i32 : i32, i32
  }
  func.func @transform_1(%arg0: i32) -> (i32, i32) {
    %c0_i32 = arith.constant 0 : i32
    %c0_i32_0 = arith.constant 0 : i32
    return %arg0, %c0_i32 : i32, i32
  }
  func.func @transform_2(%arg0: i32) -> (i32, i32) {
    %c0_i32 = arith.constant 0 : i32
    %c0_i32_0 = arith.constant 0 : i32
    return %arg0, %c0_i32 : i32, i32
  }
  func.func @transform_3(%arg0: i32) -> (i32, i32) {
    %c0_i32 = arith.constant 0 : i32
    %c0_i32_0 = arith.constant 0 : i32
    %c0_i32_1 = arith.constant 0 : i32
    return %c0_i32, %c0_i32_0 : i32, i32
  }
  func.func @transform_4(%arg0: i32) -> (i32, i32) {
    %c0_i32 = arith.constant 0 : i32
    %c0_i32_0 = arith.constant 0 : i32
    return %arg0, %c0_i32 : i32, i32
  }
}

</mosaic_0001>

<llo_original>
// kernel: query_encoder_forward.1
$region0: #{query_encoder_forward.1}
  #allocation0 [shape = 'u32[]', space=smem, size = 0x4, offset = 0x4, fixed_abs, tag = 'smem constant byte address 0x4 - core index']
  #allocation1 [shape = 'u32[144,128]{1,0:T(1,128)}', space=vmem, size = 0x12000, scoped, tag = 'internal scratch']
  %s0 = inlined_call_operand.vmem [shape: f32[16,32], index: 0, kind: input, shape index: {}]
  %s1 = inlined_call_operand.vmem [shape: f32[8,64], index: 1, kind: input, shape index: {}]
  %s2 = inlined_call_operand.vmem [shape: f32[8,16], index: 2, kind: input, shape index: {}]
  %s3 = inlined_call_operand.vmem [shape: f32[236,128], index: 3, kind: input, shape index: {}]
  %s4 = inlined_call_operand.vmem [shape: f32[8,128], index: 4, kind: output, shape index: {}]
  %s5 = sld [smem:[#allocation0]]
  $region26: #{query_encoder_forward.1} parent=0
    _
  %s7 = ssub.s32 1, %s5
  %s8 = scalar_select 0, %s7, %s5
  // Predicated region
  $region2: #{query_encoder_forward.1} parent=0 // pred_check
    _
  $region3: #{query_encoder_forward.1} parent=0 // pred_check_branch
    %10 = sbr.rel (0) target = $region5
  $region4: #{query_encoder_forward.1} parent=0 // pred_region
    _
  $region5: #{query_encoder_forward.1} parent=0 // pred_fallthru
    _
  // Predicated region
  $region6: #{query_encoder_forward.1} parent=0 // pred_check
    _
  $region7: #{query_encoder_forward.1} parent=0 // pred_check_branch
    %12 = sbr.rel (0) target = $region9
  $region8: #{query_encoder_forward.1} parent=0 // pred_region
    _
  $region9: #{query_encoder_forward.1} parent=0 // pred_fallthru
    _
  // Predicated region
  $region10: #{query_encoder_forward.1} parent=0 // pred_check
    _
  $region11: #{query_encoder_forward.1} parent=0 // pred_check_branch
    %14 = sbr.rel (0) target = $region13
  $region12: #{query_encoder_forward.1} parent=0 // pred_region
    _
  $region13: #{query_encoder_forward.1} parent=0 // pred_fallthru
    _
  // Predicated region
  $region14: #{query_encoder_forward.1} parent=0 // pred_check
    _
  $region15: #{query_encoder_forward.1} parent=0 // pred_check_branch
    %16 = sbr.rel (0) target = $region17
  $region16: #{query_encoder_forward.1} parent=0 // pred_region
    _
  $region17: #{query_encoder_forward.1} parent=0 // pred_fallthru
    _
  %v17 = vld [vmem:[%s3] sm:$0xff]
  %v18 = vld [vmem:[%s3 + $0x8] sm:$0xff]
  %v19 = vld [vmem:[%s3 + $0x10] sm:$0xff]
  %v20 = vld [vmem:[%s3 + $0x18] sm:$0xff]
  %v21 = vld [vmem:[%s3 + $0x20] sm:$0xff]
  %v22 = vld [vmem:[%s3 + $0x28] sm:$0xff]
  %v23 = vld [vmem:[%s3 + $0x30] sm:$0xff]
  %v24 = vld [vmem:[%s3 + $0x38] sm:$0xff]
  %v25 = vld [vmem:[%s3 + $0x40] sm:$0xff]
  %v26 = vld [vmem:[%s3 + $0x48] sm:$0xff]
  %v27 = vld [vmem:[%s3 + $0x50] sm:$0xff]
  %v28 = vld [vmem:[%s3 + $0x58] sm:$0xff]
  %v29 = vld [vmem:[%s3 + $0x60] sm:$0xff]
  %v30 = vld [vmem:[%s3 + $0x68] sm:$0xff]
  %v31 = vld [vmem:[%s3 + $0x70] sm:$0xff]
  %v32 = vld [vmem:[%s3 + $0x78] sm:$0xff]
  %v33 = vld [vmem:[%s3 + $0x80] sm:$0xff]
  %v34 = vld [vmem:[%s3 + $0x88] sm:$0xff]
  %v35 = vld [vmem:[%s3 + $0x90] sm:$0xff]
  %v36 = vld [vmem:[%s3 + $0x98] sm:$0xff]
  %v37 = vld [vmem:[%s3 + $0xa0] sm:$0xff]
  %v38 = vld [vmem:[%s3 + $0xa8] sm:$0xff]
  %v39 = vld [vmem:[%s3 + $0xb0] sm:$0xff]
  %v40 = vld [vmem:[%s3 + $0xb8] sm:$0xff]
  %v41 = vld [vmem:[%s3 + $0xc0] sm:$0xff]
  %v42 = vld [vmem:[%s3 + $0xc8] sm:$0xff]
  %v43 = vld [vmem:[%s3 + $0xd0] sm:$0xff]
  %v44 = vld [vmem:[%s3 + $0xd8] sm:$0xff]
  %v45 = vld [vmem:[%s3 + $0xe0] sm:$0x1]
  %v46 = vld [vmem:[%s3 + $0xeb] sm:$0x1]
  %v47 = vld [vmem:[%s0] sm:$0xff]
  %v48 = vld [vmem:[%s0 + $0x8] sm:$0xff]
  %v49 = vld [vmem:[%s1] sm:$0xff]
  %v50 = vlaneseq
  %v51 = vshrl.u32 %v50, 7
  %v52 = vsub.s32 0, %v51
  %v53 = vrot.slane %v45, %v52
  %vm54 = vcmask 261120
  %v56 = vsel %vm54, %v47, 0
  %v59 = vsel %vm54, %v48, 0
  %61 = vmatprep.subr.mxu0 0.0
  %62 = vmatpush1.msra.mxu0 %v17
  %63 = vmatprep.subr.mxu0 0.0
  %64 = vmatpush1.msra.mxu0 %v18
  %65 = vmatprep.subr.mxu0 0.0
  %66 = vmatpush1.msra.mxu0 %v19
  %67 = vmatprep.subr.mxu0 0.0
  %68 = vmatpush1.msra.mxu0 %v20
  %69 = vmatprep.subr.mxu0 0.0
  %70 = vmatpush1.msra.mxu0 0.0
  %71 = vmatprep.subr.mxu0 0.0
  %72 = vmatpush1.msra.mxu0 0.0
  %73 = vmatprep.subr.mxu0 0.0
  %74 = vmatpush1.msra.mxu0 0.0
  %75 = vmatprep.subr.mxu0 0.0
  %76 = vmatpush1.msra.mxu0 0.0
  %77 = vmatprep.subr.mxu0 0.0
  %78 = vmatpush1.msra.mxu0 0.0
  %79 = vmatprep.subr.mxu0 0.0
  %80 = vmatpush1.msra.mxu0 0.0
  %81 = vmatprep.subr.mxu0 0.0
  %82 = vmatpush1.msra.mxu0 0.0
  %83 = vmatprep.subr.mxu0 0.0
  %84 = vmatpush1.msra.mxu0 0.0
  %85 = vmatprep.subr.mxu0 0.0
  %86 = vmatpush1.msra.mxu0 0.0
  %87 = vmatprep.subr.mxu0 0.0
  %88 = vmatpush1.msra.mxu0 0.0
  %89 = vmatprep.subr.mxu0 0.0
  %90 = vmatpush1.msra.mxu0 0.0
  %91 = vmatprep.subr.mxu0 0.0
  %92 = vmatpush1.msra.mxu0 0.0
  %93 = vmatprep.subr.mxu0 0.0
  %94 = vmatpush1.msra.mxu0 0.0
  %95 = vmatprep.subr.mxu0 0.0
  %96 = vmatpush1.msra.mxu0 0.0
  %97 = vmatprep.subr.mxu0 0.0
  %98 = vmatpush1.msra.mxu0 0.0
  %99 = vmatprep.subr.mxu0 0.0
  %100 = vmatpush1.msra.mxu0 0.0
  %101 = vmatprep.subr.mxu0 0.0
  %102 = vmatpush1.msra.mxu0 0.0
  %103 = vmatprep.subr.mxu0 0.0
  %104 = vmatpush1.msra.mxu0 0.0
  %105 = vmatprep.subr.mxu0 0.0
  %106 = vmatpush1.msra.mxu0 0.0
  %107 = vmatprep.subr.mxu0 0.0
  %108 = vmatpush1.msra.mxu0 0.0
  %109 = vmatprep.subr.mxu0 0.0
  %110 = vmatpush1.msra.mxu0 0.0
  %111 = vmatprep.subr.mxu0 0.0
  %112 = vmatpush1.msra.mxu0 0.0
  %113 = vmatprep.subr.mxu0 0.0
  %114 = vmatpush1.msra.mxu0 0.0
  %115 = vmatprep.subr.mxu0 0.0
  %116 = vmatpush1.msra.mxu0 0.0
  %117 = vmatprep.subr.mxu0 0.0
  %118 = vmatpush1.msra.mxu0 0.0
  %119 = vmatprep.subr.mxu0 0.0
  %120 = vmatpush1.msra.mxu0 0.0
  %121 = vmatprep.subr.mxu0 0.0
  %122 = vmatpush1.msra.mxu0 0.0
  %123 = vmatprep.subr.mxu0 0.0
  %124 = vmatpush1.msra.mxu0 0.0
  %125 = vmatprep.mubr.f32.mxu0 0.0
  %126 = vmatmul.mubr.f32.gmra.mrb[0].mxu0 %v56
  %v127 = vpop.f32.mrb[0].mxu0
  %v128 = vadd.f32 %v53, %v127
  %v129 = vpop.f32.mrb[0].mxu0
  %130 = vmatprep.mubr.f32.mxu0 0.0
  %131 = vmatmul.mubr.f32.gmra.mrb[0].mxu0 %v59
  %v132 = vpop.f32.mrb[0].mxu0
  %v133 = vadd.f32 %v53, %v132
  %v134 = vpop.f32.mrb[0].mxu0
  %135 = vdwg.mxu0
  %v136 = vld [vmem:[%s3 + $0xe1] sm:$0x1]
  %v137 = vlaneseq
  %v138 = vshrl.u32 %v137, 7
  %v139 = vsub.s32 0, %v138
  %v140 = vrot.slane %v136, %v139
  %vm141 = vcmask 523264
  %v143 = vsel %vm141, %v49, 0
  %145 = vmatprep.subr.mxu0 0.0
  %146 = vmatpush1.msra.mxu0 %v21
  %147 = vmatprep.subr.mxu0 0.0
  %148 = vmatpush1.msra.mxu0 %v22
  %149 = vmatprep.subr.mxu0 0.0
  %150 = vmatpush1.msra.mxu0 %v23
  %151 = vmatprep.subr.mxu0 0.0
  %152 = vmatpush1.msra.mxu0 %v24
  %153 = vmatprep.subr.mxu0 0.0
  %154 = vmatpush1.msra.mxu0 %v25
  %155 = vmatprep.subr.mxu0 0.0
  %156 = vmatpush1.msra.mxu0 %v26
  %157 = vmatprep.subr.mxu0 0.0
  %158 = vmatpush1.msra.mxu0 %v27
  %159 = vmatprep.subr.mxu0 0.0
  %160 = vmatpush1.msra.mxu0 %v28
  %161 = vmatprep.subr.mxu0 0.0
  %162 = vmatpush1.msra.mxu0 0.0
  %163 = vmatprep.subr.mxu0 0.0
  %164 = vmatpush1.msra.mxu0 0.0
  %165 = vmatprep.subr.mxu0 0.0
  %166 = vmatpush1.msra.mxu0 0.0
  %167 = vmatprep.subr.mxu0 0.0
  %168 = vmatpush1.msra.mxu0 0.0
  %169 = vmatprep.subr.mxu0 0.0
  %170 = vmatpush1.msra.mxu0 0.0
  %171 = vmatprep.subr.mxu0 0.0
  %172 = vmatpush1.msra.mxu0 0.0
  %173 = vmatprep.subr.mxu0 0.0
  %174 = vmatpush1.msra.mxu0 0.0
  %175 = vmatprep.subr.mxu0 0.0
  %176 = vmatpush1.msra.mxu0 0.0
  %177 = vmatprep.subr.mxu0 0.0
  %178 = vmatpush1.msra.mxu0 0.0
  %179 = vmatprep.subr.mxu0 0.0
  %180 = vmatpush1.msra.mxu0 0.0
  %181 = vmatprep.subr.mxu0 0.0
  %182 = vmatpush1.msra.mxu0 0.0
  %183 = vmatprep.subr.mxu0 0.0
  %184 = vmatpush1.msra.mxu0 0.0
  %185 = vmatprep.subr.mxu0 0.0
  %186 = vmatpush1.msra.mxu0 0.0
  %187 = vmatprep.subr.mxu0 0.0
  %188 = vmatpush1.msra.mxu0 0.0
  %189 = vmatprep.subr.mxu0 0.0
  %190 = vmatpush1.msra.mxu0 0.0
  %191 = vmatprep.subr.mxu0 0.0
  %192 = vmatpush1.msra.mxu0 0.0
  %193 = vmatprep.subr.mxu0 0.0
  %194 = vmatpush1.msra.mxu0 0.0
  %195 = vmatprep.subr.mxu0 0.0
  %196 = vmatpush1.msra.mxu0 0.0
  %197 = vmatprep.subr.mxu0 0.0
  %198 = vmatpush1.msra.mxu0 0.0
  %199 = vmatprep.subr.mxu0 0.0
  %200 = vmatpush1.msra.mxu0 0.0
  %201 = vmatprep.subr.mxu0 0.0
  %202 = vmatpush1.msra.mxu0 0.0
  %203 = vmatprep.subr.mxu0 0.0
  %204 = vmatpush1.msra.mxu0 0.0
  %205 = vmatprep.subr.mxu0 0.0
  %206 = vmatpush1.msra.mxu0 0.0
  %207 = vmatprep.subr.mxu0 0.0
  %208 = vmatpush1.msra.mxu0 0.0
  %209 = vmatprep.mubr.f32.mxu0 0.0
  %210 = vmatmul.mubr.f32.gmra.mrb[0].mxu0 %v143
  %v211 = vpop.f32.mrb[0].mxu0
  %v212 = vadd.f32 %v140, %v211
  %v213 = vpop.f32.mrb[0].mxu0
  %214 = vdwg.mxu0
  %v215 = vld [vmem:[%s2] sm:$0xff]
  %v217 = vsel %vm54, %v212, 0
  %v220 = vsel %vm54, %v128, 0
  %v223 = vsel %vm54, %v133, 0
  %225 = vmatprep.subr.mxu0 0.0
  %226 = vmatpush1.xpose.msra.mxu0 %v220
  %227 = vmatprep.subr.mxu0 0.0
  %228 = vmatpush1.xpose.msra.mxu0 %v223
  %229 = vmatprep.subr.mxu0 0.0
  %230 = vmatpush1.xpose.msra.mxu0 0.0
  %231 = vmatprep.subr.mxu0 0.0
  %232 = vmatpush1.xpose.msra.mxu0 0.0
  %233 = vmatprep.subr.mxu0 0.0
  %234 = vmatpush1.xpose.msra.mxu0 0.0
  %235 = vmatprep.subr.mxu0 0.0
  %236 = vmatpush1.xpose.msra.mxu0 0.0
  %237 = vmatprep.subr.mxu0 0.0
  %238 = vmatpush1.xpose.msra.mxu0 0.0
  %239 = vmatprep.subr.mxu0 0.0
  %240 = vmatpush1.xpose.msra.mxu0 0.0
  %241 = vmatprep.subr.mxu0 0.0
  %242 = vmatpush1.xpose.msra.mxu0 0.0
  %243 = vmatprep.subr.mxu0 0.0
  %244 = vmatpush1.xpose.msra.mxu0 0.0
  %245 = vmatprep.subr.mxu0 0.0
  %246 = vmatpush1.xpose.msra.mxu0 0.0
  %247 = vmatprep.subr.mxu0 0.0
  %248 = vmatpush1.xpose.msra.mxu0 0.0
  %249 = vmatprep.subr.mxu0 0.0
  %250 = vmatpush1.xpose.msra.mxu0 0.0
  %251 = vmatprep.subr.mxu0 0.0
  %252 = vmatpush1.xpose.msra.mxu0 0.0
  %253 = vmatprep.subr.mxu0 0.0
  %254 = vmatpush1.xpose.msra.mxu0 0.0
  %255 = vmatprep.subr.mxu0 0.0
  %256 = vmatpush1.xpose.msra.mxu0 0.0
  %257 = vmatprep.subr.mxu0 0.0
  %258 = vmatpush1.xpose.msra.mxu0 0.0
  %259 = vmatprep.subr.mxu0 0.0
  %260 = vmatpush1.xpose.msra.mxu0 0.0
  %261 = vmatprep.subr.mxu0 0.0
  %262 = vmatpush1.xpose.msra.mxu0 0.0
  %263 = vmatprep.subr.mxu0 0.0
  %264 = vmatpush1.xpose.msra.mxu0 0.0
  %265 = vmatprep.subr.mxu0 0.0
  %266 = vmatpush1.xpose.msra.mxu0 0.0
  %267 = vmatprep.subr.mxu0 0.0
  %268 = vmatpush1.xpose.msra.mxu0 0.0
  %269 = vmatprep.subr.mxu0 0.0
  %270 = vmatpush1.xpose.msra.mxu0 0.0
  %271 = vmatprep.subr.mxu0 0.0
  %272 = vmatpush1.xpose.msra.mxu0 0.0
  %273 = vmatprep.subr.mxu0 0.0
  %274 = vmatpush1.xpose.msra.mxu0 0.0
  %275 = vmatprep.subr.mxu0 0.0
  %276 = vmatpush1.xpose.msra.mxu0 0.0
  %277 = vmatprep.subr.mxu0 0.0
  %278 = vmatpush1.xpose.msra.mxu0 0.0
  %279 = vmatprep.subr.mxu0 0.0
  %280 = vmatpush1.xpose.msra.mxu0 0.0
  %281 = vmatprep.subr.mxu0 0.0
  %282 = vmatpush1.xpose.msra.mxu0 0.0
  %283 = vmatprep.subr.mxu0 0.0
  %284 = vmatpush1.xpose.msra.mxu0 0.0
  %285 = vmatprep.subr.mxu0 0.0
  %286 = vmatpush1.xpose.msra.mxu0 0.0
  %287 = vmatprep.subr.mxu0 0.0
  %288 = vmatpush1.xpose.msra.mxu0 0.0
  %289 = vmatprep.mubr.f32.mxu0 0.0
  %290 = vmatmul.mubr.f32.gmra.mrb[0].mxu0 %v217
  %v291 = vpop.f32.mrb[0].mxu0
  %v292 = vadd.f32 %v215, %v291
  %v293 = vpop.f32.mrb[0].mxu0
  %294 = vdwg.mxu0
  %vm295 = vcmask 130048
  %v296 = vsel %vm295, %v292, -inf
  %297 = vmax.xlane.f32.xlu0 %v296
  %v298 = vpop.xlane.xlu0 %297
  %v299 = vsub.f32 %v292, %v298
  %v300 = vmul.f32 %v299, 1.442695
  %v301 = vpow.pop %v300
  %v302 = vsel %vm295, %v301, 0.0
  %303 = vadd.xlane.f32.xlu0 %v302
  %v304 = vpop.xlane.xlu0 %303
  %v305 = vrcp.pop %v304
  %v306 = vmul.f32 %v301, %v305
  %307 = vrot.lane.b32.xlu0 %v128, 96
  %v308 = vpop.permute.xlu0 %307
  %309 = vrot.lane.b32.xlu0 %v133, 96
  %v310 = vpop.permute.xlu0 %309
  %v314 = vsel %vm295, %v306, 0
  %316 = vmatprep.subr.mxu0 0.0
  %317 = vmatpush1.msra.mxu0 %v308
  %318 = vmatprep.subr.mxu0 0.0
  %319 = vmatpush1.msra.mxu0 %v310
  %320 = vmatprep.subr.mxu0 0.0
  %321 = vmatpush1.msra.mxu0 0.0
  %322 = vmatprep.subr.mxu0 0.0
  %323 = vmatpush1.msra.mxu0 0.0
  %324 = vmatprep.subr.mxu0 0.0
  %325 = vmatpush1.msra.mxu0 0.0
  %326 = vmatprep.subr.mxu0 0.0
  %327 = vmatpush1.msra.mxu0 0.0
  %328 = vmatprep.subr.mxu0 0.0
  %329 = vmatpush1.msra.mxu0 0.0
  %330 = vmatprep.subr.mxu0 0.0
  %331 = vmatpush1.msra.mxu0 0.0
  %332 = vmatprep.subr.mxu0 0.0
  %333 = vmatpush1.msra.mxu0 0.0
  %334 = vmatprep.subr.mxu0 0.0
  %335 = vmatpush1.msra.mxu0 0.0
  %336 = vmatprep.subr.mxu0 0.0
  %337 = vmatpush1.msra.mxu0 0.0
  %338 = vmatprep.subr.mxu0 0.0
  %339 = vmatpush1.msra.mxu0 0.0
  %340 = vmatprep.subr.mxu0 0.0
  %341 = vmatpush1.msra.mxu0 0.0
  %342 = vmatprep.subr.mxu0 0.0
  %343 = vmatpush1.msra.mxu0 0.0
  %344 = vmatprep.subr.mxu0 0.0
  %345 = vmatpush1.msra.mxu0 0.0
  %346 = vmatprep.subr.mxu0 0.0
  %347 = vmatpush1.msra.mxu0 0.0
  %348 = vmatprep.subr.mxu0 0.0
  %349 = vmatpush1.msra.mxu0 0.0
  %350 = vmatprep.subr.mxu0 0.0
  %351 = vmatpush1.msra.mxu0 0.0
  %352 = vmatprep.subr.mxu0 0.0
  %353 = vmatpush1.msra.mxu0 0.0
  %354 = vmatprep.subr.mxu0 0.0
  %355 = vmatpush1.msra.mxu0 0.0
  %356 = vmatprep.subr.mxu0 0.0
  %357 = vmatpush1.msra.mxu0 0.0
  %358 = vmatprep.subr.mxu0 0.0
  %359 = vmatpush1.msra.mxu0 0.0
  %360 = vmatprep.subr.mxu0 0.0
  %361 = vmatpush1.msra.mxu0 0.0
  %362 = vmatprep.subr.mxu0 0.0
  %363 = vmatpush1.msra.mxu0 0.0
  %364 = vmatprep.subr.mxu0 0.0
  %365 = vmatpush1.msra.mxu0 0.0
  %366 = vmatprep.subr.mxu0 0.0
  %367 = vmatpush1.msra.mxu0 0.0
  %368 = vmatprep.subr.mxu0 0.0
  %369 = vmatpush1.msra.mxu0 0.0
  %370 = vmatprep.subr.mxu0 0.0
  %371 = vmatpush1.msra.mxu0 0.0
  %372 = vmatprep.subr.mxu0 0.0
  %373 = vmatpush1.msra.mxu0 0.0
  %374 = vmatprep.subr.mxu0 0.0
  %375 = vmatpush1.msra.mxu0 0.0
  %376 = vmatprep.subr.mxu0 0.0
  %377 = vmatpush1.msra.mxu0 0.0
  %378 = vmatprep.subr.mxu0 0.0
  %379 = vmatpush1.msra.mxu0 0.0
  %380 = vmatprep.mubr.f32.mxu0 0.0
  %381 = vmatmul.mubr.f32.gmra.mrb[0].mxu0 %v314
  %v382 = vpop.f32.mrb[0].mxu0
  %v383 = vadd.f32 0.0, %v382
  %v384 = vpop.f32.mrb[0].mxu0
  %385 = vdwg.mxu0
  %v386 = vld [vmem:[%s3 + $0xe2] sm:$0x1]
  %v387 = vlaneseq
  %v388 = vshrl.u32 %v387, 7
  %v389 = vsub.s32 0, %v388
  %v390 = vrot.slane %v386, %v389
  %v392 = vsel %vm54, %v383, 0
  %394 = vmatprep.subr.mxu0 0.0
  %395 = vmatpush1.msra.mxu0 %v29
  %396 = vmatprep.subr.mxu0 0.0
  %397 = vmatpush1.msra.mxu0 %v30
  %398 = vmatprep.subr.mxu0 0.0
  %399 = vmatpush1.msra.mxu0 %v31
  %400 = vmatprep.subr.mxu0 0.0
  %401 = vmatpush1.msra.mxu0 %v32
  %402 = vmatprep.subr.mxu0 0.0
  %403 = vmatpush1.msra.mxu0 0.0
  %404 = vmatprep.subr.mxu0 0.0
  %405 = vmatpush1.msra.mxu0 0.0
  %406 = vmatprep.subr.mxu0 0.0
  %407 = vmatpush1.msra.mxu0 0.0
  %408 = vmatprep.subr.mxu0 0.0
  %409 = vmatpush1.msra.mxu0 0.0
  %410 = vmatprep.subr.mxu0 0.0
  %411 = vmatpush1.msra.mxu0 0.0
  %412 = vmatprep.subr.mxu0 0.0
  %413 = vmatpush1.msra.mxu0 0.0
  %414 = vmatprep.subr.mxu0 0.0
  %415 = vmatpush1.msra.mxu0 0.0
  %416 = vmatprep.subr.mxu0 0.0
  %417 = vmatpush1.msra.mxu0 0.0
  %418 = vmatprep.subr.mxu0 0.0
  %419 = vmatpush1.msra.mxu0 0.0
  %420 = vmatprep.subr.mxu0 0.0
  %421 = vmatpush1.msra.mxu0 0.0
  %422 = vmatprep.subr.mxu0 0.0
  %423 = vmatpush1.msra.mxu0 0.0
  %424 = vmatprep.subr.mxu0 0.0
  %425 = vmatpush1.msra.mxu0 0.0
  %426 = vmatprep.subr.mxu0 0.0
  %427 = vmatpush1.msra.mxu0 0.0
  %428 = vmatprep.subr.mxu0 0.0
  %429 = vmatpush1.msra.mxu0 0.0
  %430 = vmatprep.subr.mxu0 0.0
  %431 = vmatpush1.msra.mxu0 0.0
  %432 = vmatprep.subr.mxu0 0.0
  %433 = vmatpush1.msra.mxu0 0.0
  %434 = vmatprep.subr.mxu0 0.0
  %435 = vmatpush1.msra.mxu0 0.0
  %436 = vmatprep.subr.mxu0 0.0
  %437 = vmatpush1.msra.mxu0 0.0
  %438 = vmatprep.subr.mxu0 0.0
  %439 = vmatpush1.msra.mxu0 0.0
  %440 = vmatprep.subr.mxu0 0.0
  %441 = vmatpush1.msra.mxu0 0.0
  %442 = vmatprep.subr.mxu0 0.0
  %443 = vmatpush1.msra.mxu0 0.0
  %444 = vmatprep.subr.mxu0 0.0
  %445 = vmatpush1.msra.mxu0 0.0
  %446 = vmatprep.subr.mxu0 0.0
  %447 = vmatpush1.msra.mxu0 0.0
  %448 = vmatprep.subr.mxu0 0.0
  %449 = vmatpush1.msra.mxu0 0.0
  %450 = vmatprep.subr.mxu0 0.0
  %451 = vmatpush1.msra.mxu0 0.0
  %452 = vmatprep.subr.mxu0 0.0
  %453 = vmatpush1.msra.mxu0 0.0
  %454 = vmatprep.subr.mxu0 0.0
  %455 = vmatpush1.msra.mxu0 0.0
  %456 = vmatprep.subr.mxu0 0.0
  %457 = vmatpush1.msra.mxu0 0.0
  %458 = vmatprep.mubr.f32.mxu0 0.0
  %459 = vmatmul.mubr.f32.gmra.mrb[0].mxu0 %v392
  %v460 = vpop.f32.mrb[0].mxu0
  %v461 = vadd.f32 %v390, %v460
  %v462 = vpop.f32.mrb[0].mxu0
  %463 = vdwg.mxu0
  %v464 = vld [vmem:[%s3 + $0xe3] sm:$0x1]
  %v465 = vld [vmem:[%s3 + $0xe4] sm:$0x1]
  %v466 = vsel %vm54, %v461, 0.0
  %467 = vadd.xlane.f32.xlu0 %v466
  %v468 = vpop.xlane.xlu0 %467
  %v469 = vrcp.pop 32.0
  %v470 = vmul.f32 %v468, %v469
  %v471 = vsub.f32 %v461, %v470
  %v472 = vmul.f32 %v471, %v471
  %v473 = vsel %vm54, %v472, 0.0
  %474 = vadd.xlane.f32.xlu0 %v473
  %v475 = vpop.xlane.xlu0 %474
  %v476 = vmul.f32 %v475, %v469
  %v477 = vadd.f32 %v476, 1e-05
  %v478 = vrsqrt.pop %v477
  %v479 = vmul.f32 %v471, %v478
  %v480 = vlaneseq
  %v481 = vshrl.u32 %v480, 7
  %v482 = vsub.s32 0, %v481
  %v483 = vrot.slane %v464, %v482
  %v484 = vmul.f32 %v479, %v483
  %v485 = vlaneseq
  %v486 = vshrl.u32 %v485, 7
  %v487 = vsub.s32 0, %v486
  %v488 = vrot.slane %v465, %v487
  %v489 = vadd.f32 %v484, %v488
  %v490 = vsel %vm54, %v489, 0.0
  %v491 = vadd.f32 %v490, %v49
  %v492 = vld [vmem:[%s3 + $0xe5] sm:$0x1]
  %v493 = vlaneseq
  %v494 = vshrl.u32 %v493, 7
  %v495 = vsub.s32 0, %v494
  %v496 = vrot.slane %v492, %v495
  %v498 = vsel %vm141, %v491, 0
  %500 = vmatprep.subr.mxu0 0.0
  %501 = vmatpush1.msra.mxu0 %v33
  %502 = vmatprep.subr.mxu0 0.0
  %503 = vmatpush1.msra.mxu0 %v34
  %504 = vmatprep.subr.mxu0 0.0
  %505 = vmatpush1.msra.mxu0 %v35
  %506 = vmatprep.subr.mxu0 0.0
  %507 = vmatpush1.msra.mxu0 %v36
  %508 = vmatprep.subr.mxu0 0.0
  %509 = vmatpush1.msra.mxu0 %v37
  %510 = vmatprep.subr.mxu0 0.0
  %511 = vmatpush1.msra.mxu0 %v38
  %512 = vmatprep.subr.mxu0 0.0
  %513 = vmatpush1.msra.mxu0 %v39
  %514 = vmatprep.subr.mxu0 0.0
  %515 = vmatpush1.msra.mxu0 %v40
  %516 = vmatprep.subr.mxu0 0.0
  %517 = vmatpush1.msra.mxu0 0.0
  %518 = vmatprep.subr.mxu0 0.0
  %519 = vmatpush1.msra.mxu0 0.0
  %520 = vmatprep.subr.mxu0 0.0
  %521 = vmatpush1.msra.mxu0 0.0
  %522 = vmatprep.subr.mxu0 0.0
  %523 = vmatpush1.msra.mxu0 0.0
  %524 = vmatprep.subr.mxu0 0.0
  %525 = vmatpush1.msra.mxu0 0.0
  %526 = vmatprep.subr.mxu0 0.0
  %527 = vmatpush1.msra.mxu0 0.0
  %528 = vmatprep.subr.mxu0 0.0
  %529 = vmatpush1.msra.mxu0 0.0
  %530 = vmatprep.subr.mxu0 0.0
  %531 = vmatpush1.msra.mxu0 0.0
  %532 = vmatprep.subr.mxu0 0.0
  %533 = vmatpush1.msra.mxu0 0.0
  %534 = vmatprep.subr.mxu0 0.0
  %535 = vmatpush1.msra.mxu0 0.0
  %536 = vmatprep.subr.mxu0 0.0
  %537 = vmatpush1.msra.mxu0 0.0
  %538 = vmatprep.subr.mxu0 0.0
  %539 = vmatpush1.msra.mxu0 0.0
  %540 = vmatprep.subr.mxu0 0.0
  %541 = vmatpush1.msra.mxu0 0.0
  %542 = vmatprep.subr.mxu0 0.0
  %543 = vmatpush1.msra.mxu0 0.0
  %544 = vmatprep.subr.mxu0 0.0
  %545 = vmatpush1.msra.mxu0 0.0
  %546 = vmatprep.subr.mxu0 0.0
  %547 = vmatpush1.msra.mxu0 0.0
  %548 = vmatprep.subr.mxu0 0.0
  %549 = vmatpush1.msra.mxu0 0.0
  %550 = vmatprep.subr.mxu0 0.0
  %551 = vmatpush1.msra.mxu0 0.0
  %552 = vmatprep.subr.mxu0 0.0
  %553 = vmatpush1.msra.mxu0 0.0
  %554 = vmatprep.subr.mxu0 0.0
  %555 = vmatpush1.msra.mxu0 0.0
  %556 = vmatprep.subr.mxu0 0.0
  %557 = vmatpush1.msra.mxu0 0.0
  %558 = vmatprep.subr.mxu0 0.0
  %559 = vmatpush1.msra.mxu0 0.0
  %560 = vmatprep.subr.mxu0 0.0
  %561 = vmatpush1.msra.mxu0 0.0
  %562 = vmatprep.subr.mxu0 0.0
  %563 = vmatpush1.msra.mxu0 0.0
  %564 = vmatprep.mubr.f32.mxu0 0.0
  %565 = vmatmul.mubr.f32.gmra.mrb[0].mxu0 %v498
  %v566 = vpop.f32.mrb[0].mxu0
  %v567 = vadd.f32 %v496, %v566
  %v568 = vpop.f32.mrb[0].mxu0
  %569 = vdwg.mxu0
  %v570 = vld [vmem:[%s3 + $0xe6] sm:$0x1]
  %v571 = vld [vmem:[%s3 + $0xe7] sm:$0x1]
  %v572 = vsel %vm54, %v567, 0.0
  %573 = vadd.xlane.f32.xlu0 %v572
  %v574 = vpop.xlane.xlu0 %573
  %v575 = vmul.f32 %v574, %v469
  %v576 = vsub.f32 %v567, %v575
  %v577 = vmul.f32 %v576, %v576
  %v578 = vsel %vm54, %v577, 0.0
  %579 = vadd.xlane.f32.xlu0 %v578
  %v580 = vpop.xlane.xlu0 %579
  %v581 = vmul.f32 %v580, %v469
  %v582 = vadd.f32 %v581, 1e-05
  %v583 = vrsqrt.pop %v582
  %v584 = vmul.f32 %v576, %v583
  %v585 = vlaneseq
  %v586 = vshrl.u32 %v585, 7
  %v587 = vsub.s32 0, %v586
  %v588 = vrot.slane %v570, %v587
  %v589 = vmul.f32 %v584, %v588
  %v590 = vlaneseq
  %v591 = vshrl.u32 %v590, 7
  %v592 = vsub.s32 0, %v591
  %v593 = vrot.slane %v571, %v592
  %v594 = vadd.f32 %v589, %v593
  %v595 = vmax.f32 %v594, 0.0
  %v596 = vld [vmem:[%s3 + $0xe8] sm:$0x1]
  %v597 = vlaneseq
  %v598 = vshrl.u32 %v597, 7
  %v599 = vsub.s32 0, %v598
  %v600 = vrot.slane %v596, %v599
  %v602 = vsel %vm54, %v595, 0
  %604 = vmatprep.subr.mxu0 0.0
  %605 = vmatpush1.msra.mxu0 %v41
  %606 = vmatprep.subr.mxu0 0.0
  %607 = vmatpush1.msra.mxu0 %v42
  %608 = vmatprep.subr.mxu0 0.0
  %609 = vmatpush1.msra.mxu0 %v43
  %610 = vmatprep.subr.mxu0 0.0
  %611 = vmatpush1.msra.mxu0 %v44
  %612 = vmatprep.subr.mxu0 0.0
  %613 = vmatpush1.msra.mxu0 0.0
  %614 = vmatprep.subr.mxu0 0.0
  %615 = vmatpush1.msra.mxu0 0.0
  %616 = vmatprep.subr.mxu0 0.0
  %617 = vmatpush1.msra.mxu0 0.0
  %618 = vmatprep.subr.mxu0 0.0
  %619 = vmatpush1.msra.mxu0 0.0
  %620 = vmatprep.subr.mxu0 0.0
  %621 = vmatpush1.msra.mxu0 0.0
  %622 = vmatprep.subr.mxu0 0.0
  %623 = vmatpush1.msra.mxu0 0.0
  %624 = vmatprep.subr.mxu0 0.0
  %625 = vmatpush1.msra.mxu0 0.0
  %626 = vmatprep.subr.mxu0 0.0
  %627 = vmatpush1.msra.mxu0 0.0
  %628 = vmatprep.subr.mxu0 0.0
  %629 = vmatpush1.msra.mxu0 0.0
  %630 = vmatprep.subr.mxu0 0.0
  %631 = vmatpush1.msra.mxu0 0.0
  %632 = vmatprep.subr.mxu0 0.0
  %633 = vmatpush1.msra.mxu0 0.0
  %634 = vmatprep.subr.mxu0 0.0
  %635 = vmatpush1.msra.mxu0 0.0
  %636 = vmatprep.subr.mxu0 0.0
  %637 = vmatpush1.msra.mxu0 0.0
  %638 = vmatprep.subr.mxu0 0.0
  %639 = vmatpush1.msra.mxu0 0.0
  %640 = vmatprep.subr.mxu0 0.0
  %641 = vmatpush1.msra.mxu0 0.0
  %642 = vmatprep.subr.mxu0 0.0
  %643 = vmatpush1.msra.mxu0 0.0
  %644 = vmatprep.subr.mxu0 0.0
  %645 = vmatpush1.msra.mxu0 0.0
  %646 = vmatprep.subr.mxu0 0.0
  %647 = vmatpush1.msra.mxu0 0.0
  %648 = vmatprep.subr.mxu0 0.0
  %649 = vmatpush1.msra.mxu0 0.0
  %650 = vmatprep.subr.mxu0 0.0
  %651 = vmatpush1.msra.mxu0 0.0
  %652 = vmatprep.subr.mxu0 0.0
  %653 = vmatpush1.msra.mxu0 0.0
  %654 = vmatprep.subr.mxu0 0.0
  %655 = vmatpush1.msra.mxu0 0.0
  %656 = vmatprep.subr.mxu0 0.0
  %657 = vmatpush1.msra.mxu0 0.0
  %658 = vmatprep.subr.mxu0 0.0
  %659 = vmatpush1.msra.mxu0 0.0
  %660 = vmatprep.subr.mxu0 0.0
  %661 = vmatpush1.msra.mxu0 0.0
  %662 = vmatprep.subr.mxu0 0.0
  %663 = vmatpush1.msra.mxu0 0.0
  %664 = vmatprep.subr.mxu0 0.0
  %665 = vmatpush1.msra.mxu0 0.0
  %666 = vmatprep.subr.mxu0 0.0
  %667 = vmatpush1.msra.mxu0 0.0
  %668 = vmatprep.mubr.f32.mxu0 0.0
  %669 = vmatmul.mubr.f32.gmra.mrb[0].mxu0 %v602
  %v670 = vpop.f32.mrb[0].mxu0
  %v671 = vadd.f32 %v600, %v670
  %v672 = vpop.f32.mrb[0].mxu0
  %673 = vdwg.mxu0
  %v674 = vld [vmem:[%s3 + $0xe9] sm:$0x1]
  %v675 = vld [vmem:[%s3 + $0xea] sm:$0x1]
  %v676 = vsel %vm54, %v671, 0.0
  %677 = vadd.xlane.f32.xlu0 %v676
  %v678 = vpop.xlane.xlu0 %677
  %v679 = vmul.f32 %v678, %v469
  %v680 = vsub.f32 %v671, %v679
  %v681 = vmul.f32 %v680, %v680
  %v682 = vsel %vm54, %v681, 0.0
  %683 = vadd.xlane.f32.xlu0 %v682
  %v684 = vpop.xlane.xlu0 %683
  %v685 = vmul.f32 %v684, %v469
  %v686 = vadd.f32 %v685, 1e-05
  %v687 = vrsqrt.pop %v686
  %v688 = vmul.f32 %v680, %v687
  %v689 = vlaneseq
  %v690 = vshrl.u32 %v689, 7
  %v691 = vsub.s32 0, %v690
  %v692 = vrot.slane %v674, %v691
  %v693 = vmul.f32 %v688, %v692
  %v694 = vlaneseq
  %v695 = vshrl.u32 %v694, 7
  %v696 = vsub.s32 0, %v695
  %v697 = vrot.slane %v675, %v696
  %v698 = vadd.f32 %v693, %v697
  %v699 = vmax.f32 %v698, 0.0
  %701 = vrot.lane.b32.xlu0 %v699, 32
  %v702 = vpop.permute.xlu0 %701
  %704 = vrot.lane.b32.xlu0 %v699, 64
  %v705 = vpop.permute.xlu0 %704
  %707 = vrot.lane.b32.xlu0 %v699, 96
  %v708 = vpop.permute.xlu0 %707
  %v710 = vsel %vm54, %v699, %v702
  %v711 = vsel %vm141, %v710, %v705
  %vm712 = vcmask 785408
  %v713 = vsel %vm712, %v711, %v708
  %v714 = vlaneseq
  %v715 = vshrl.u32 %v714, 7
  %v716 = vsub.s32 0, %v715
  %v717 = vrot.slane %v46, %v716
  %v718 = vadd.f32 %v713, %v717
  %719 = vst [vmem:[%s4] sm:$0xff] %v718
  // Predicated region
  $region18: #{query_encoder_forward.1} parent=0 // pred_check
    _
  $region19: #{query_encoder_forward.1} parent=0 // pred_check_branch
    %721 = sbr.rel (0) target = $region21
  $region20: #{query_encoder_forward.1} parent=0 // pred_region
    _
  $region21: #{query_encoder_forward.1} parent=0 // pred_fallthru
    _
  // Predicated region
  $region22: #{query_encoder_forward.1} parent=0 // pred_check
    _
  $region23: #{query_encoder_forward.1} parent=0 // pred_check_branch
    %723 = sbr.rel (0) target = $region25
  $region24: #{query_encoder_forward.1} parent=0 // pred_region
    _
  $region25: #{query_encoder_forward.1} parent=0 // pred_fallthru
    _

</llo_original>
